<compile_context>
chip_gen: v6e
topology: v6e:2x2x1
jax: 0.10.0
libtpu: 0.0.40
codegen_flags: <defaults>
</compile_context>

<pallas_src>
import functools

import jax
import jax.numpy as jnp
from jax.experimental import pallas as pl
from jax.experimental.pallas import tpu as pltpu


def _round_up(x: int, m: int) -> int:
    return (x + m - 1) // m * m


def _vmem_limits():
    """(vmem_limit_bytes for CompilerParams, working-set budget for tiling)."""
    try:
        cap = int(pltpu.get_tpu_info().vmem_capacity_bytes)
    except Exception:
        cap = 64 * 1024 * 1024          # conservative: v7x physical per-TC VMEM
    limit = min(cap * 3 // 4, 100 * 1024 * 1024)   # ~48 MiB on v7x, ~96 MiB v5e/v6e
    budget = int(limit * 0.7)                      # headroom for compiler temporaries
    return limit, budget


def _pick_s_tile(C: int, s_needed: int, logit_item: int, label_item: int,
                 budget_bytes: int, max_s: int = 1024) -> int:
    """Largest sublane-row tile (multiple of 8, or the full S dim) in budget."""
    # VMEM bytes per pixel column, INCLUDING in-kernel intermediates:
    per_px = (2 * C * logit_item      # double-buffered logits block
              + 2 * label_item        # double-buffered labels block
              + 3 * C * 4             # f32 (C, S, 128) temps: shifted/iota/select/exp
              + 8 * 4)                # f32 (S, 128) temps + accumulator
    cap_px = max(8 * 128, budget_bytes // per_px)
    cap_s = max(8, (cap_px // 128) // 8 * 8)
    cap_s = min(cap_s, max_s)
    if s_needed <= cap_s:
        return s_needed               # single tile == full (padded) S dim
    return cap_s


def _gce_kernel(logits_ref, labels_ref, out_ref, acc_ref, *,
                hw: int, s_tile: int, tiles_per_core: int, needs_mask: bool):
    p = pl.program_id(1)
    j = pl.program_id(2)

    @pl.when(j == 0)
    def _():
        acc_ref[...] = jnp.zeros_like(acc_ref)

    x = logits_ref[0]                                   # (C, s_tile, 128), native dtype
    lbl = labels_ref[0, 0].astype(jnp.int32)            # (s_tile, 128)

    # Class-axis reductions run over the leading dim -> C-1 pure VPU ops,
    # everything per-pixel is a full (s_tile, 128) vreg tile.
    m = jnp.max(x, axis=0)                              # (s_tile, 128)
    shifted = x - m[None]                               # (C, s_tile, 128)
    cls_ids = jax.lax.broadcasted_iota(jnp.int32, x.shape, 0)
    picked = jnp.sum(jnp.where(cls_ids == lbl[None], shifted, 0), axis=0)
    sum_exp = jnp.sum(jnp.exp(shifted.astype(jnp.float32)), axis=0)
    loss = jnp.log(sum_exp) - picked.astype(jnp.float32)   # (s_tile, 128) f32

    if needs_mask:
        tile_start = (p * tiles_per_core + j) * (s_tile * 128)
        tile_end = tile_start + s_tile * 128

        @pl.when(tile_end <= hw)                        # fully valid tile: no mask work
        def _():
            acc_ref[...] += loss

        @pl.when(tile_end > hw)                         # overlaps padding: mask it
        def _():
            row = jax.lax.broadcasted_iota(jnp.int32, loss.shape, 0)
            lane = jax.lax.broadcasted_iota(jnp.int32, loss.shape, 1)
            idx = tile_start + row * 128 + lane
            acc_ref[...] += jnp.where(idx < hw, loss, 0.0)
    else:
        acc_ref[...] += loss                            # pure VPU add

    @pl.when(j == pl.num_programs(2) - 1)
    def _():
        total = jnp.sum(acc_ref[...], axis=1, keepdims=True)   # lane reduce (XLU, last tile only)
        total = jnp.sum(total, axis=0, keepdims=True)           # sublane reduce -> (1, 1)
        out_ref[...] = total[None, None]                         # (1, 1, 1, 1)


def generalized_ce_loss(predict, target, *, lambda_weight: float = 1.0,
                        reduction: str = "mean", max_s_tile: int = 1024):
    """predict: [N, C, H, W] float logits; target: [N, 1, H, W] or [N, H, W] ints."""
    # TODO(synk): ignore_index / apply_sigmoid (BCE) / reduction='none' not implemented.
    if target.ndim == 4 and target.shape[1] == 1:
        target = target[:, 0, :, :]
    assert target.ndim == 3, "target must be [N,H,W] or [N,1,H,W]"
    assert predict.ndim == 4, "predict must be [N,C,H,W]"

    N, C, H, W = predict.shape
    HW = H * W

    # Keep narrow integer labels narrow (less HBM traffic); upcast in-kernel.
    if target.dtype.itemsize > 4 or not jnp.issubdtype(target.dtype, jnp.integer):
        target = target.astype(jnp.int32)

    logit_item = jnp.dtype(predict.dtype).itemsize
    label_item = jnp.dtype(target.dtype).itemsize

    vmem_limit, vmem_budget = _vmem_limits()
    s_needed = pl.cdiv(HW, 128)
    s_tile = _pick_s_tile(C, s_needed, logit_item, label_item, vmem_budget, max_s_tile)

    num_tiles = pl.cdiv(s_needed, s_tile)
    if num_tiles >= 2:
        P = 2                     # second parallel axis -> both v7x TCs busy even for N == 1
    elif N < 2 and s_needed >= 16:
        s_tile = _round_up(pl.cdiv(s_needed, 2), 8)   # split the single tile across cores
        num_tiles = pl.cdiv(s_needed, s_tile)
        P = 2
    else:
        P = 1
    J = pl.cdiv(num_tiles, P)     # pixel tiles per core
    s_pad = P * J * s_tile
    hw_pad = s_pad * 128

    # Zero-copy views: NCHW -> [N, C, HW] -> [N, C, S, 128]; no transpose.
    logits = predict.reshape(N, C, HW)
    labels = target.reshape(N, 1, HW)
    if hw_pad != HW:
        logits = jnp.pad(logits, ((0, 0), (0, 0), (0, hw_pad - HW)))
        labels = jnp.pad(labels, ((0, 0), (0, 0), (0, hw_pad - HW)))
    logits = logits.reshape(N, C, s_pad, 128)
    labels = labels.reshape(N, 1, s_pad, 128)

    kernel = functools.partial(_gce_kernel, hw=HW, s_tile=s_tile,
                               tiles_per_core=J, needs_mask=(hw_pad != HW))

    partial_sums = pl.pallas_call(
        kernel,
        out_shape=jax.ShapeDtypeStruct((N, P, 1, 1), jnp.float32),
        grid_spec=pltpu.PrefetchScalarGridSpec(
            num_scalar_prefetch=0,
            grid=(N, P, J),
            in_specs=[
                pl.BlockSpec((1, C, s_tile, 128), lambda n, p, j: (n, 0, p * J + j, 0)),
                pl.BlockSpec((1, 1, s_tile, 128), lambda n, p, j: (n, 0, p * J + j, 0)),
            ],
            out_specs=pl.BlockSpec((1, 1, 1, 1), lambda n, p, j: (n, p, 0, 0)),
            scratch_shapes=[pltpu.VMEM((s_tile, 128), jnp.float32)],
        ),
        compiler_params=pltpu.CompilerParams(
            dimension_semantics=("parallel", "parallel", "arbitrary"),
            vmem_limit_bytes=int(vmem_limit)),
    )(logits, labels)

    total = jnp.sum(partial_sums)
    if reduction == "mean":
        total = total / jnp.float32(N * HW)
    elif reduction != "sum":
        raise ValueError("only 'mean' and 'sum' reductions are implemented")
    return total * jnp.float32(lambda_weight)


def _reference(predict, target, lambda_weight=1.0):
    if target.ndim == 4 and target.shape[1] == 1:
        target = target[:, 0, :, :]
    logits = jnp.transpose(predict, (0, 2, 3, 1)).astype(jnp.float32)  # NHWC
    lse = jax.nn.logsumexp(logits, axis=-1)
    picked = jnp.take_along_axis(logits, target[..., None].astype(jnp.int32),
                                 axis=-1)[..., 0]
    return jnp.mean(lse - picked) * lambda_weight


if __name__ == "__main__":
    key = jax.random.PRNGKey(0)
    k1, k2, k3, k4, k5, k6 = jax.random.split(key, 6)

    # Case 1: canonical small shape (HW multiple of 128, no masking).
    N, C, H, W = 2, 4, 16, 16
    predict = jax.random.normal(k1, (N, C, H, W), dtype=jnp.float32)
    target = jax.random.randint(k2, (N, 1, H, W), 0, C, dtype=jnp.int32)
    loss = jax.block_until_ready(generalized_ce_loss(predict, target, lambda_weight=1.0))
    ref = _reference(predict, target, lambda_weight=1.0)
    assert jnp.allclose(loss, ref, atol=1e-5, rtol=1e-5), (loss, ref)

    # Case 2: HW not a multiple of 128 (exercises the gated tail mask).
    p2 = jax.random.normal(k3, (1, 5, 9, 9), dtype=jnp.float32)
    t2 = jax.random.randint(k4, (1, 9, 9), 0, 5, dtype=jnp.int32)
    l2 = jax.block_until_ready(generalized_ce_loss(p2, t2))
    r2 = _reference(p2, t2)
    assert jnp.allclose(l2, r2, atol=1e-5, rtol=1e-5), (l2, r2)

    # Case 3: N=1 with enough pixels to use the 2-way pixel-tile split (v7x path).
    p3 = jax.random.normal(k5, (1, 3, 48, 48), dtype=jnp.float32)
    t3 = jax.random.randint(k6, (1, 1, 48, 48), 0, 3, dtype=jnp.int32)
    l3 = jax.block_until_ready(generalized_ce_loss(p3, t3, lambda_weight=0.5))
    r3 = _reference(p3, t3, lambda_weight=0.5)
    assert jnp.allclose(l3, r3, atol=1e-5, rtol=1e-5), (l3, r3)

    print("KERNEL_OK")
</pallas_src>

<mosaic_0001>
module attributes {stable_mosaic.version = 11 : i64} {
  func.func @_gce_kernel(%arg0: i32, %arg1: i32, %arg2: i32, %arg3: memref<1x4x2x128xf32, #tpu.memory_space<vmem>>, %arg4: memref<1x1x2x128xi32, #tpu.memory_space<vmem>>, %arg5: memref<1x1x1x1xf32, #tpu.memory_space<vmem>>, %arg6: memref<2x128xf32, #tpu.memory_space<vmem>>) attributes {dimension_semantics = [#tpu.dimension_semantics<parallel>, #tpu.dimension_semantics<parallel>, #tpu.dimension_semantics<arbitrary>], iteration_bounds = array<i64: 2, 1, 1>, scalar_prefetch = 0 : i64, scratch_operands = 1 : i64, tpu.core_type = #tpu.core_type<tc>, window_params = [{transform_indices = @transform_0, window_bounds = array<i64: 1, 4, 2, 128>}, {transform_indices = @transform_1, window_bounds = array<i64: 1, 1, 2, 128>}, {transform_indices = @transform_2, window_bounds = array<i64: 1, 1, 1, 1>}]} {
    %c0_i32 = arith.constant 0 : i32
    %0 = arith.cmpi eq, %arg2, %c0_i32 : i32
    %1 = arith.extui %0 : i1 to i32
    %c0_i32_0 = arith.constant 0 : i32
    %2 = arith.cmpi ne, %1, %c0_i32_0 : i32
    scf.if %2 {
      %cst_17 = arith.constant 0.000000e+00 : f32
      %29 = vector.broadcast %cst_17 : f32 to vector<2x128xf32>
      %c0_18 = arith.constant 0 : index
      %c0_19 = arith.constant 0 : index
      %30 = vector.load %arg6[%c0_18, %c0_19] : memref<2x128xf32, #tpu.memory_space<vmem>>, vector<2x128xf32>
      tpu.vector_store %arg6[%c0_18, %c0_19], %29 {strides = array<i32>} : memref<2x128xf32, #tpu.memory_space<vmem>>, vector<2x128xf32>,
    } else {
    }
    %c0 = arith.constant 0 : index
    %c0_1 = arith.constant 0 : index
    %c0_2 = arith.constant 0 : index
    %c0_3 = arith.constant 0 : index
    %3 = vector.load %arg3[%c0, %c0_1, %c0_2, %c0_3] : memref<1x4x2x128xf32, #tpu.memory_space<vmem>>, vector<1x4x2x128xf32>
    %4 = vector.shape_cast %3 : vector<1x4x2x128xf32> to vector<4x2x128xf32>
    %c0_4 = arith.constant 0 : index
    %c0_5 = arith.constant 0 : index
    %c0_6 = arith.constant 0 : index
    %c0_7 = arith.constant 0 : index
    %5 = vector.load %arg4[%c0_4, %c0_5, %c0_6, %c0_7] : memref<1x1x2x128xi32, #tpu.memory_space<vmem>>, vector<1x1x2x128xi32>
    %6 = vector.shape_cast %5 : vector<1x1x2x128xi32> to vector<2x128xi32>
    %cst = arith.constant dense<0xFF800000> : vector<2x128xf32>
    %7 = vector.multi_reduction <maximumf>, %4, %cst [0] : vector<4x2x128xf32> to vector<2x128xf32>
    %8 = vector.shape_cast %7 : vector<2x128xf32> to vector<1x2x128xf32>
    %9 = vector.broadcast %8 : vector<1x2x128xf32> to vector<4x2x128xf32>
    %10 = arith.subf %4, %9 : vector<4x2x128xf32>
    %11 = tpu.iota {dimensions = array<i32: 0>} : vector<4x2x128xi32>
    %12 = vector.shape_cast %6 : vector<2x128xi32> to vector<1x2x128xi32>
    %13 = vector.broadcast %12 : vector<1x2x128xi32> to vector<4x2x128xi32>
    %14 = arith.cmpi eq, %11, %13 : vector<4x2x128xi32>
    %c0_i32_8 = arith.constant 0 : i32
    %15 = arith.sitofp %c0_i32_8 : i32 to f32
    %16 = vector.broadcast %15 : f32 to vector<4x2x128xf32>
    %17 = arith.select %14, %10, %16 : vector<4x2x128xi1>, vector<4x2x128xf32>
    %cst_9 = arith.constant dense<0.000000e+00> : vector<2x128xf32>
    %18 = vector.multi_reduction <add>, %17, %cst_9 [0] : vector<4x2x128xf32> to vector<2x128xf32>
    %19 = math.exp %10 : vector<4x2x128xf32>
    %cst_10 = arith.constant dense<0.000000e+00> : vector<2x128xf32>
    %20 = vector.multi_reduction <add>, %19, %cst_10 [0] : vector<4x2x128xf32> to vector<2x128xf32>
    %21 = math.log %20 : vector<2x128xf32>
    %22 = arith.subf %21, %18 : vector<2x128xf32>
    %c0_11 = arith.constant 0 : index
    %c0_12 = arith.constant 0 : index
    %23 = vector.load %arg6[%c0_11, %c0_12] : memref<2x128xf32, #tpu.memory_space<vmem>>, vector<2x128xf32>
    %24 = arith.addf %23, %22 : vector<2x128xf32>
    %c0_13 = arith.constant 0 : index
    %c0_14 = arith.constant 0 : index
    %25 = vector.load %arg6[%c0_13, %c0_14] : memref<2x128xf32, #tpu.memory_space<vmem>>, vector<2x128xf32>
    tpu.vector_store %arg6[%c0_13, %c0_14], %24 {strides = array<i32>} : memref<2x128xf32, #tpu.memory_space<vmem>>, vector<2x128xf32>,
    %c0_i32_15 = arith.constant 0 : i32
    %26 = arith.cmpi eq, %arg2, %c0_i32_15 : i32
    %27 = arith.extui %26 : i1 to i32
    %c0_i32_16 = arith.constant 0 : i32
    %28 = arith.cmpi ne, %27, %c0_i32_16 : i32
    scf.if %28 {
      %c0_17 = arith.constant 0 : index
      %c0_18 = arith.constant 0 : index
      %29 = vector.load %arg6[%c0_17, %c0_18] : memref<2x128xf32, #tpu.memory_space<vmem>>, vector<2x128xf32>
      %cst_19 = arith.constant dense<0.000000e+00> : vector<2xf32>
      %30 = vector.multi_reduction <add>, %29, %cst_19 [1] : vector<2x128xf32> to vector<2xf32>
      %31 = vector.shape_cast %30 : vector<2xf32> to vector<2x1xf32>
      %cst_20 = arith.constant dense<0.000000e+00> : vector<1xf32>
      %32 = vector.multi_reduction <add>, %31, %cst_20 [0] : vector<2x1xf32> to vector<1xf32>
      %33 = vector.shape_cast %32 : vector<1xf32> to vector<1x1xf32>
      %34 = vector.shape_cast %33 : vector<1x1xf32> to vector<1x1x1x1xf32>
      %c0_21 = arith.constant 0 : index
      %c0_22 = arith.constant 0 : index
      %c0_23 = arith.constant 0 : index
      %c0_24 = arith.constant 0 : index
      %35 = vector.load %arg5[%c0_21, %c0_22, %c0_23, %c0_24] : memref<1x1x1x1xf32, #tpu.memory_space<vmem>>, vector<1x1x1x1xf32>
      tpu.vector_store %arg5[%c0_21, %c0_22, %c0_23, %c0_24], %34 {strides = array<i32>} : memref<1x1x1x1xf32, #tpu.memory_space<vmem>>, vector<1x1x1x1xf32>,
    } else {
    }
    return
  }
  func.func @transform_0(%arg0: i32, %arg1: i32, %arg2: i32) -> (i32, i32, i32, i32) {
    %c1_i32 = arith.constant 1 : i32
    %0 = arith.muli %arg1, %c1_i32 : i32
    %1 = arith.addi %0, %arg2 : i32
    %c0_i32 = arith.constant 0 : i32
    %c0_i32_0 = arith.constant 0 : i32
    %c0_i32_1 = arith.constant 0 : i32
    return %arg0, %c0_i32, %1, %c0_i32_0 : i32, i32, i32, i32
  }
  func.func @transform_1(%arg0: i32, %arg1: i32, %arg2: i32) -> (i32, i32, i32, i32) {
    %c1_i32 = arith.constant 1 : i32
    %0 = arith.muli %arg1, %c1_i32 : i32
    %1 = arith.addi %0, %arg2 : i32
    %c0_i32 = arith.constant 0 : i32
    %c0_i32_0 = arith.constant 0 : i32
    %c0_i32_1 = arith.constant 0 : i32
    return %arg0, %c0_i32, %1, %c0_i32_0 : i32, i32, i32, i32
  }
  func.func @transform_2(%arg0: i32, %arg1: i32, %arg2: i32) -> (i32, i32, i32, i32) {
    %c0_i32 = arith.constant 0 : i32
    %c0_i32_0 = arith.constant 0 : i32
    %c0_i32_1 = arith.constant 0 : i32
    return %arg0, %arg1, %c0_i32, %c0_i32_0 : i32, i32, i32, i32
  }
}

</mosaic_0001>

<llo_original>
// kernel: tpu_custom_call.1
$region0: #{tpu_custom_call.1}
  #allocation0 [shape = 'u32[]', space=smem, size = 0x4, offset = 0x4, fixed_abs, tag = 'smem constant byte address 0x4 - core index']
  #allocation1 [shape = 'u32[144,128]{1,0:T(1,128)}', space=vmem, size = 0x12000, scoped, tag = 'internal scratch']
  #allocation2 [shape = 'f32[2,128]{1,0:T(2,128)}', space=vmem, size = 0x400, scoped, tag = 'scratch operand']
  %s0 = inlined_call_operand.hbm [shape: f32[2,4,2,128], index: 0, kind: input, shape index: {}]
  %s1 = inlined_call_operand.hbm [shape: s32[2,1,2,128], index: 1, kind: input, shape index: {}]
  %s2 = inlined_call_operand.vmem [shape: f32[2,1,1,1], index: 2, kind: output, shape index: {}]
  %s3 = sld [smem:[#allocation0]]
  $region57: #{tpu_custom_call.1} parent=0
    _
  %s5 = ssub.s32 1, %s3
  %s6 = scalar_select 0, %s5, %s3
  $region1: #{tpu_custom_call.1} parent=0
    #allocation3 [shape = 'u8[8192]{0}', space=vmem, size = 0x2000, scoped, tag = 'input window, operand 0']
    #allocation4 [shape = 's32[2]{0}', space=sflag, size = 0x8, scoped, tag = 'scoped memory for tpu_custom_call.1']
    #allocation5 [shape = 'u8[2048]{0}', space=vmem, size = 0x800, scoped, tag = 'input window, operand 1']
    #allocation6 [shape = 's32[2]{0}', space=sflag, size = 0x8, scoped, tag = 'scoped memory for tpu_custom_call.1']
    %7 = vsyncpa [#allocation4], 0
    %s8 = scalar_lea.sflag [#allocation4], 1
    %9 = vsyncpa %s8, 0
    %10 = vsyncpa [#allocation6], 0
    %s11 = scalar_lea.sflag [#allocation6], 1
    %12 = vsyncpa %s11, 0
    loop: start=0, step=1, limit=4
    $region2: #{tpu_custom_call.1} parent=1 // loop_pre_header
      _
    $region3: #{tpu_custom_call.1} parent=1 // loop_header
      %s14 = sphi 0, %s18
      %p15 = scmp.ge.s32.totalorder %s14, 4
      %s21 = sphi 0, %s40
      %s22 = sphi 0, %s36
      %s23 = sphi 0, %s32
      %s24 = sphi 0, %s21
      %s25 = sphi 0, %s22
      %s26 = sphi 0, %s23
      %s27 = sphi 0, %s24
      %s28 = sphi 0, %s25
      %s29 = sphi 0, %s26
      %s47 = sphi 0, %s49
      %s50 = sphi 0, %s47
      %s51 = sphi 0, %s50
      %s67 = sphi 0, %s51
      %s77 = sphi 0, %s79
      %s80 = sphi 0, %s77
      %s81 = sphi 0, %s80
      %s97 = sphi 0, %s81
      %s105 = sphi 0, %s107
      %s108 = sphi 0, %s105
      %s109 = sphi 0, %s108
      %s125 = sphi 0, %s109
    $region4: #{tpu_custom_call.1} parent=1 // loop_header_branch
      %17 = sbr.rel (%p15) target = $region8
    $region5: #{tpu_custom_call.1} parent=1 // loop_body
      %s19 = ssub.s32 %s14, 1
      %s20 = ssub.s32 %s14, 2
      %s30 = sadd.s32 1, %s23
      %p31 = scmp.ge.s32.totalorder %s30, 1
      %s32 = scalar_select %p31, 0, %s30
      %s33 = sadd.s32 1, %s22
      %s34 = scalar_select %p31, %s33, %s22
      %p35 = scmp.ge.s32.totalorder %s34, 1
      %s36 = scalar_select %p35, 0, %s34
      %s37 = sadd.s32 1, %s21
      %s38 = scalar_select %p35, %s37, %s21
      %p39 = scmp.ge.s32.totalorder %s38, 2
      %s40 = scalar_select %p39, 0, %s38
      %s41 = sadd.s32 %s22, %s23
      %s42 = sadd.s32 %s36, %s32
      %s43 = ssub.s32 %s21, %s40
      %s44 = ssub.s32 %s41, %s42
      %s45 = sor.u32 %s43, %s44
      %p46 = scmp.eq.s32.totalorder %s45, 0
      %s48 = sadd.s32 %s47, 1
      %s49 = scalar_select %p46, %s47, %s48
      %p52 = pneg %p46
      %p53 = scmp.eq.s32.totalorder %s14, 1
      %p54 = por %p52, %p53
      %p55 = scmp.ne.s32.totalorder %s47, %s50
      %p56 = scmp.eq.s32.totalorder %s14, 0
      %p57 = por %p55, %p56
      %p58 = scmp.ne.s32.totalorder %s47, %s50
      %p59 = scmp.eq.s32.totalorder %s19, 1
      %p60 = por %p58, %p59
      %p61 = scmp.ne.s32.totalorder %s50, %s51
      %p62 = scmp.eq.s32.totalorder %s19, 0
      %p63 = por %p61, %p62
      %p64 = scmp.ne.s32.totalorder %s50, %s51
      %p65 = scmp.eq.s32.totalorder %s20, 1
      %p66 = por %p64, %p65
      %p68 = scmp.ne.s32.totalorder %s51, %s67
      %p69 = scmp.eq.s32.totalorder %s20, 0
      %p70 = por %p68, %p69
      %s71 = sadd.s32 %s22, %s23
      %s72 = sadd.s32 %s36, %s32
      %s73 = ssub.s32 %s21, %s40
      %s74 = ssub.s32 %s71, %s72
      %s75 = sor.u32 %s73, %s74
      %p76 = scmp.eq.s32.totalorder %s75, 0
      %s78 = sadd.s32 %s77, 1
      %s79 = scalar_select %p76, %s77, %s78
      %p82 = pneg %p76
      %p83 = scmp.eq.s32.totalorder %s14, 1
      %p84 = por %p82, %p83
      %p85 = scmp.ne.s32.totalorder %s77, %s80
      %p86 = scmp.eq.s32.totalorder %s14, 0
      %p87 = por %p85, %p86
      %p88 = scmp.ne.s32.totalorder %s77, %s80
      %p89 = scmp.eq.s32.totalorder %s19, 1
      %p90 = por %p88, %p89
      %p91 = scmp.ne.s32.totalorder %s80, %s81
      %p92 = scmp.eq.s32.totalorder %s19, 0
      %p93 = por %p91, %p92
      %p94 = scmp.ne.s32.totalorder %s80, %s81
      %p95 = scmp.eq.s32.totalorder %s20, 1
      %p96 = por %p94, %p95
      %p98 = scmp.ne.s32.totalorder %s81, %s97
      %p99 = scmp.eq.s32.totalorder %s20, 0
      %p100 = por %p98, %p99
      %s101 = ssub.s32 %s21, %s40
      %s102 = ssub.s32 %s22, %s36
      %s103 = sor.u32 %s101, %s102
      %p104 = scmp.eq.s32.totalorder %s103, 0
      %s106 = sadd.s32 %s105, 1
      %s107 = scalar_select %p104, %s105, %s106
      %p110 = pneg %p104
      %p111 = scmp.eq.s32.totalorder %s14, 1
      %p112 = por %p110, %p111
      %p113 = scmp.ne.s32.totalorder %s105, %s108
      %p114 = scmp.eq.s32.totalorder %s14, 0
      %p115 = por %p113, %p114
      %p116 = scmp.ne.s32.totalorder %s105, %s108
      %p117 = scmp.eq.s32.totalorder %s19, 1
      %p118 = por %p116, %p117
      %p119 = scmp.ne.s32.totalorder %s108, %s109
      %p120 = scmp.eq.s32.totalorder %s19, 0
      %p121 = por %p119, %p120
      %p122 = scmp.ne.s32.totalorder %s108, %s109
      %p123 = scmp.eq.s32.totalorder %s20, 1
      %p124 = por %p122, %p123
      %p126 = scmp.ne.s32.totalorder %s109, %s125
      %p127 = scmp.eq.s32.totalorder %s20, 0
      %p128 = por %p126, %p127
      %p129 = scmp.le.s32.totalorder 1, %s14
      %p130 = scmp.lt.s32.totalorder %s14, 3
      %p131 = pnand %p129, %p130
      %p132 = pneg %p131
      // Predicated region
      $region9: #{tpu_custom_call.1} parent=5 // pred_check
        _
      $region10: #{tpu_custom_call.1} parent=5 // pred_check_branch
        %134 = sbr.rel (%p131) target = $region12
      $region11: #{tpu_custom_call.1} parent=5 // pred_region
        %s135 = ssub.s32 %s14, 1
      $region12: #{tpu_custom_call.1} parent=5 // pred_fallthru
        _
      %p136 = scmp.lt.s32.totalorder %s14, 2
      // Predicated region
      $region13: #{tpu_custom_call.1} parent=5 // pred_check
        %p137 = pneg %p136
      $region14: #{tpu_custom_call.1} parent=5 // pred_check_branch
        %139 = sbr.rel (%p137) target = $region16
      $region15: #{tpu_custom_call.1} parent=5 // pred_region
        // Predicated region
        $region17: #{tpu_custom_call.1} parent=15 // pred_check
          %p140 = pneg %p57
        $region18: #{tpu_custom_call.1} parent=15 // pred_check_branch
          %142 = sbr.rel (%p140) target = $region20
        $region19: #{tpu_custom_call.1} parent=15 // pred_region
          %s143 = sand.u32 %s47, 1
          %s144 = scalar_lea.sflag [#allocation4], %s143
          %s145 = sand.u32 %s47, 1
          %s146 = smul.addr %s145, 8
          %s147 = scalar_lea.vmem [#allocation3], %s146
          %s148 = sadd.s32 %s22, %s23
          %s150 = ssub.s32 128, 128
          %151 = vsyncadd %s144, %s150
          %s152 = smul.addr %s21, 4
          %s153 = sadd.s32 %s148, %s152
          %s154 = smul.addr %s153, 32
          %s155 = scalar_lea.hbm %s0, %s154
          %s156 = sshll.u32 %s147, 4
          %s157 = int_to_ptr.vmem [resolvable:$true] %s156
          %162 = dma.hbm_to_vmem [thread:$0]  %s155, 128, %s157, %s144, 32, 32, 2
        $region20: #{tpu_custom_call.1} parent=15 // pred_fallthru
          _
        // Predicated region
        $region21: #{tpu_custom_call.1} parent=15 // pred_check
          %p163 = pneg %p87
        $region22: #{tpu_custom_call.1} parent=15 // pred_check_branch
          %165 = sbr.rel (%p163) target = $region24
        $region23: #{tpu_custom_call.1} parent=15 // pred_region
          %s166 = sand.u32 %s77, 1
          %s167 = scalar_lea.sflag [#allocation6], %s166
          %s168 = sand.u32 %s77, 1
          %s169 = smul.addr %s168, 2
          %s170 = scalar_lea.vmem [#allocation5], %s169
          %s171 = sadd.s32 %s22, %s23
          %s173 = ssub.s32 32, 32
          %174 = vsyncadd %s167, %s173
          %s175 = sadd.s32 %s171, %s21
          %s176 = smul.addr %s175, 32
          %s177 = scalar_lea.hbm %s1, %s176
          %s179 = sshll.u32 %s170, 4
          %s180 = int_to_ptr.vmem [resolvable:$true] %s179
          %182 = dma.hbm_to_vmem [thread:$0]  %s177, 32, %s180, %s167
        $region24: #{tpu_custom_call.1} parent=15 // pred_fallthru
          _
      $region16: #{tpu_custom_call.1} parent=5 // pred_fallthru
        _
      %p183 = scmp.le.s32.totalorder 1, %s14
      %p184 = scmp.lt.s32.totalorder %s14, 3
      %p185 = pnand %p183, %p184
      %p186 = pneg %p185
      // Predicated region
      $region25: #{tpu_custom_call.1} parent=5 // pred_check
        _
      $region26: #{tpu_custom_call.1} parent=5 // pred_check_branch
        %188 = sbr.rel (%p185) target = $region28
      $region27: #{tpu_custom_call.1} parent=5 // pred_region
        %s189 = ssub.s32 %s14, 1
        %s190 = sand.u32 %s50, 1
        %s191 = scalar_lea.sflag [#allocation4], %s190
        %s192 = sand.u32 %s50, 1
        %s193 = smul.addr %s192, 8
        %s194 = scalar_lea.vmem [#allocation3], %s193
        // Predicated region
        $region29: #{tpu_custom_call.1} parent=27 // pred_check
          %p195 = pneg %p63
        $region30: #{tpu_custom_call.1} parent=27 // pred_check_branch
          %197 = sbr.rel (%p195) target = $region32
        $region31: #{tpu_custom_call.1} parent=27 // pred_region
          %198 = dma.done %s191, 128
        $region32: #{tpu_custom_call.1} parent=27 // pred_fallthru
          _
        %s199 = sand.u32 %s80, 1
        %s200 = scalar_lea.sflag [#allocation6], %s199
        %s201 = sand.u32 %s80, 1
        %s202 = smul.addr %s201, 2
        %s203 = scalar_lea.vmem [#allocation5], %s202
        // Predicated region
        $region33: #{tpu_custom_call.1} parent=27 // pred_check
          %p204 = pneg %p93
        $region34: #{tpu_custom_call.1} parent=27 // pred_check_branch
          %206 = sbr.rel (%p204) target = $region36
        $region35: #{tpu_custom_call.1} parent=27 // pred_region
          %207 = dma.done %s200, 32
        $region36: #{tpu_custom_call.1} parent=27 // pred_fallthru
          _
        %s208 = sand.u32 %s50, 1
        %s209 = scalar_lea.sflag [#allocation4], %s208
        %s210 = sand.u32 %s50, 1
        %s211 = smul.addr %s210, 8
        %s212 = scalar_lea.vmem [#allocation3], %s211
        %p213 = pneg %p63
        %p214 = pneg %p60
        %s215 = sand.u32 %s80, 1
        %s216 = scalar_lea.sflag [#allocation6], %s215
        %s217 = sand.u32 %s80, 1
        %s218 = smul.addr %s217, 2
        %s219 = scalar_lea.vmem [#allocation5], %s218
        %p220 = pneg %p93
        %p221 = pneg %p90
        %p222 = pneg %p121
        %p223 = pneg %p118
        %p224 = scmp.lt.s32.totalorder %s24, 1
        %s225 = scalar_select %p224, %s24, 1
        %p226 = scmp.lt.s32.totalorder %s25, 0
        %s227 = scalar_select %p226, %s25, 0
        %s228 = sadd.s32 %s227, %s225
        %s229 = scalar_lea.vmem %s2, %s228
        %s230 = sadd.s32 %s25, %s26
        %s231 = sadd.s32 %s25, %s26
        %p232 = scmp.lt.s32.totalorder %s24, 1
        %s233 = scalar_select %p232, %s24, 1
        %p234 = scmp.lt.s32.totalorder %s25, 0
        %s235 = scalar_select %p234, %s25, 0
        %s236 = sadd.s32 %s235, %s233
        %s237 = scalar_lea.vmem %s2, %s236
        %p238 = scmp.eq.s32.totalorder %s26, 0
        // Predicated region
        $region37: #{tpu_custom_call.1} parent=27 // pred_check
          %p239 = pneg %p238
        $region38: #{tpu_custom_call.1} parent=27 // pred_check_branch
          %241 = sbr.rel (%p239) target = $region40
        $region39: #{tpu_custom_call.1} parent=27 // pred_region
          %242 = vst [vmem:[#allocation2] sm:$0x3] 0.0
        $region40: #{tpu_custom_call.1} parent=27 // pred_fallthru
          _
        %v243 = vld [vmem:[%s194] sm:$0x3]
        %v244 = vld [vmem:[%s194 + $0x2] sm:$0x3]
        %v245 = vld [vmem:[%s194 + $0x4] sm:$0x3]
        %v246 = vld [vmem:[%s194 + $0x6] sm:$0x3]
        %v247 = vld [vmem:[%s203] sm:$0x3]
        %vm248 = vcmask 1041408
        %v249 = vsel %vm248, %v243, -inf
        %v250 = vsel %vm248, %v244, -inf
        %v251 = vsel %vm248, %v245, -inf
        %v252 = vsel %vm248, %v246, -inf
        %v253 = vmax.f32 %v249, %v250
        %v254 = vmax.f32 %v251, %v252
        %v255 = vmax.f32 %v253, %v254
        %v256 = vsub.f32 %v243, %v255
        %v257 = vsub.f32 %v244, %v255
        %v258 = vsub.f32 %v245, %v255
        %v259 = vsub.f32 %v246, %v255
        %vm260 = vcmp.eq.s32.totalorder %v247, 0
        %vm261 = vcmp.eq.s32.totalorder %v247, 1
        %vm262 = vcmp.eq.s32.totalorder %v247, 2
        %vm263 = vcmp.eq.s32.totalorder %v247, 3
        %v264 = vsel %vm260, %v256, 0.0
        %v265 = vsel %vm261, %v257, 0.0
        %v266 = vsel %vm262, %v258, 0.0
        %v267 = vsel %vm263, %v259, 0.0
        %v268 = vsel %vm248, %v264, 0.0
        %v269 = vsel %vm248, %v265, 0.0
        %v270 = vadd.f32 %v268, %v269
        %v271 = vsel %vm248, %v266, 0.0
        %v272 = vadd.f32 %v270, %v271
        %v273 = vsel %vm248, %v267, 0.0
        %v274 = vadd.f32 %v272, %v273
        %v275 = vmul.f32 %v256, 1.442695
        %v276 = vpow.pop %v275
        %v277 = vmul.f32 %v257, 1.442695
        %v278 = vpow.pop %v277
        %v279 = vmul.f32 %v258, 1.442695
        %v280 = vpow.pop %v279
        %v281 = vmul.f32 %v259, 1.442695
        %v282 = vpow.pop %v281
        %v283 = vsel %vm248, %v276, 0.0
        %v284 = vsel %vm248, %v278, 0.0
        %v285 = vadd.f32 %v283, %v284
        %v286 = vsel %vm248, %v280, 0.0
        %v287 = vadd.f32 %v285, %v286
        %v288 = vsel %vm248, %v282, 0.0
        %v289 = vadd.f32 %v287, %v288
        %v290 = vlog2.pop %v289
        %v291 = vmul.f32 %v290, 0.6931472
        %v292 = vsub.f32 %v291, %v274
        %v293 = vld [vmem:[#allocation2] sm:$0x3]
        %v294 = vadd.f32 %v293, %v292
        %295 = vst [vmem:[#allocation2] sm:$0x3] %v294
        // Predicated region
        $region41: #{tpu_custom_call.1} parent=27 // pred_check
          %p296 = pneg %p238
        $region42: #{tpu_custom_call.1} parent=27 // pred_check_branch
          %298 = sbr.rel (%p296) target = $region44
        $region43: #{tpu_custom_call.1} parent=27 // pred_region
          %v299 = vld [vmem:[#allocation2] sm:$0x3]
          %v300 = vsel %vm248, %v299, 0.0
          %301 = vadd.xlane.f32.xlu0 %v300
          %v302 = vpop.xlane.xlu0 %301
          %v303 = vsel %vm248, %v302, 0.0
          %v304 = vrot.slane %v303, 4
          %v305 = vadd.f32 %v303, %v304
          %v306 = vrot.slane %v305, 2
          %v307 = vadd.f32 %v305, %v306
          %v308 = vrot.slane %v307, 1
          %v309 = vadd.f32 %v307, %v308
          %vm310 = vcmask 0
          %311 = vst.msk [vmem:[%s237] sm:$0x1] %vm310, %v309
        $region44: #{tpu_custom_call.1} parent=27 // pred_fallthru
          _
        %p312 = scmp.lt.s32.totalorder %s24, 1
        %s313 = scalar_select %p312, %s24, 1
        %p314 = scmp.lt.s32.totalorder %s25, 0
        %s315 = scalar_select %p314, %s25, 0
        %s316 = sadd.s32 %s315, %s313
        %s317 = scalar_lea.vmem %s2, %s316
        // Predicated region
        $region45: #{tpu_custom_call.1} parent=27 // pred_check
          %p318 = pneg %p118
        $region46: #{tpu_custom_call.1} parent=27 // pred_check_branch
          %320 = sbr.rel (%p318) target = $region48
        $region47: #{tpu_custom_call.1} parent=27 // pred_region
          _
        $region48: #{tpu_custom_call.1} parent=27 // pred_fallthru
          _
      $region28: #{tpu_custom_call.1} parent=5 // pred_fallthru
        _
      %p321 = scmp.le.s32.totalorder 2, %s14
      // Predicated region
      $region49: #{tpu_custom_call.1} parent=5 // pred_check
        %p322 = pneg %p321
      $region50: #{tpu_custom_call.1} parent=5 // pred_check_branch
        %324 = sbr.rel (%p322) target = $region52
      $region51: #{tpu_custom_call.1} parent=5 // pred_region
        %s325 = ssub.s32 %s14, 2
        // Predicated region
        $region53: #{tpu_custom_call.1} parent=51 // pred_check
          %p326 = pneg %p124
        $region54: #{tpu_custom_call.1} parent=51 // pred_check_branch
          %328 = sbr.rel (%p326) target = $region56
        $region55: #{tpu_custom_call.1} parent=51 // pred_region
          %p329 = scmp.lt.s32.totalorder %s27, 1
          %s330 = scalar_select %p329, %s27, 1
          %p331 = scmp.lt.s32.totalorder %s28, 0
          %s332 = scalar_select %p331, %s28, 0
          %s333 = sadd.s32 %s332, %s330
          %s334 = scalar_lea.vmem %s2, %s333
        $region56: #{tpu_custom_call.1} parent=51 // pred_fallthru
          _
      $region52: #{tpu_custom_call.1} parent=5 // pred_fallthru
        _
    $region6: #{tpu_custom_call.1} parent=1 // loop_footer
      %s18 = sadd.s32 1, %s14
    $region7: #{tpu_custom_call.1} parent=1 // loop_footer_branch
      %13 = sbr.rel target = $region3
    $region8: #{tpu_custom_call.1} parent=1 // loop_exit
      _
    %335 = vsyncpa [#allocation4], 1
    %s336 = scalar_lea.sflag [#allocation4], 1
    %337 = vsyncpa %s336, 1
    %338 = vsyncpa [#allocation6], 1
    %s339 = scalar_lea.sflag [#allocation6], 1
    %340 = vsyncpa %s339, 1

</llo_original>
